<compile_context>
chip_gen: v6e
topology: v6e:2x2x1
jax: 0.10.0
libtpu: 0.0.40
codegen_flags: <defaults>
</compile_context>

<pallas_src>
import math

import jax
import jax.numpy as jnp
from jax.experimental import pallas as pl
from jax.experimental.pallas import tpu as pltpu


def _interp_taps_1d(out_size, in_size):
    """Static 2-tap bilinear (align_corners=True) source indices and fractions."""
    taps = []
    for o in range(out_size):
        src = 0.0 if out_size == 1 else o * (in_size - 1) / (out_size - 1)
        i0 = min(int(math.floor(src)), in_size - 1)
        i1 = min(i0 + 1, in_size - 1)
        taps.append((i0, i1, float(src - i0)))
    return taps


def _interp_matrix(out_size, in_size):
    """(out_size, in_size) dense 1-D interpolation matrix (align_corners=True)."""
    mat = [[0.0] * in_size for _ in range(out_size)]
    for o, (i0, i1, f) in enumerate(_interp_taps_1d(out_size, in_size)):
        mat[o][i0] += 1.0 - f
        mat[o][i1] += f
    return jnp.array(mat, dtype=jnp.float32)


def _make_fusion_kernel(Hi, Wi, S, taps_h):
    def kernel(x1_ref, x2_ref, w1_ref, w2_ref, awt_ref, o_ref, acc_ref):
        # x1_ref : (1, C1, P1)   bf16  input1, flattened + lane-padded spatial
        # x2_ref : (1, C2, S*S)  bf16  input2, flattened spatial
        # w1_ref : (C2, C1)      bf16  1x1-conv weight for input1
        # w2_ref : (C2, C2)      bf16  1x1-conv weight for input2
        # awt_ref: (Wi, S)       bf16  width-interp matrix (transposed)
        # o_ref  : (1, C2, S*S)  f32
        # acc_ref: (C2, S*S)     f32   VMEM scratch for the upsampled branch
        x1 = x1_ref[0]
        # 1x1 conv (channel mix) on the small Hi*Wi grid: one dense MXU matmul.
        t1 = jnp.dot(w1_ref[...], x1, preferred_element_type=jnp.float32)
        t1 = t1.astype(jnp.bfloat16)

        # Separable bilinear upsample, align_corners=True.
        # (a) width interp: per input row hi, (C2, Wi) x (Wi, S) on the MXU.
        #     (static unroll; Hi is small and slices are compile-time constant)
        cw = []
        for hi in range(Hi):
            row = t1[:, hi * Wi:(hi + 1) * Wi]
            cw.append(jnp.dot(row, awt_ref[...],
                              preferred_element_type=jnp.float32))
        # (b) height interp: exact 2-tap static blend per output row (VPU),
        #     staged into a lane-contiguous f32 scratch.
        for ho in range(S):
            h0, h1, f = taps_h[ho]
            if f == 0.0:
                blended = cw[h0]
            else:
                blended = (1.0 - f) * cw[h0] + f * cw[h1]
            acc_ref[:, ho * S:(ho + 1) * S] = blended

        # 1x1 conv on input2 + add + ReLU (f32 elementwise), lane-dense store.
        t2 = jnp.dot(w2_ref[...], x2_ref[0], preferred_element_type=jnp.float32)
        o_ref[0] = jnp.maximum(acc_ref[...] + t2, 0.0).astype(o_ref.dtype)

    return kernel


def fusion(input1, input2, w1, w2, upsample_size):
    """input1: (N, C1, Hi, Wi); input2: (N, C2, S, S) with S == upsample_size;
    w1: (C2, C1, 1, 1); w2: (C2, C2, 1, 1).  Returns (N, C2, S, S)."""
    N, C1, Hi, Wi = input1.shape
    N2, C2, H2, W2 = input2.shape
    S = int(upsample_size)
    assert N == N2 and H2 == S and W2 == S, "input2 spatial must equal upsample_size"

    HW = Hi * Wi
    P1 = ((HW + 127) // 128) * 128          # lane-pad flattened spatial to 128
    SS = S * S

    x1f = input1.reshape(N, C1, HW).astype(jnp.bfloat16)
    if P1 != HW:
        x1f = jnp.pad(x1f, ((0, 0), (0, 0), (0, P1 - HW)))
    x2f = input2.reshape(N, C2, SS).astype(jnp.bfloat16)
    w1m = w1[:, :, 0, 0].astype(jnp.bfloat16)         # (C2, C1)
    w2m = w2[:, :, 0, 0].astype(jnp.bfloat16)         # (C2, C2)
    a_wT = _interp_matrix(S, Wi).T.astype(jnp.bfloat16)   # (Wi, S)
    taps_h = _interp_taps_1d(S, Hi)                    # static height taps

    kernel = _make_fusion_kernel(Hi, Wi, S, taps_h)

    flops = N * (2 * C2 * C1 * P1            # conv1
                 + 2 * C2 * HW * S           # width interp
                 + 3 * C2 * SS               # height blend
                 + 2 * C2 * C2 * SS          # conv2
                 + 2 * C2 * SS)              # add + relu
    bytes_accessed = ((x1f.size + x2f.size + w1m.size + w2m.size + a_wT.size) * 2
                      + N * C2 * SS * 4)

    out = pl.pallas_call(
        kernel,
        out_shape=jax.ShapeDtypeStruct((N, C2, SS), input1.dtype),
        grid_spec=pltpu.PrefetchScalarGridSpec(
            num_scalar_prefetch=0,
            grid=(N,),                        # one grid step per batch element
            in_specs=[
                pl.BlockSpec((1, C1, P1), lambda n: (n, 0, 0)),
                pl.BlockSpec((1, C2, SS), lambda n: (n, 0, 0)),
                pl.BlockSpec((C2, C1), lambda n: (0, 0)),
                pl.BlockSpec((C2, C2), lambda n: (0, 0)),
                pl.BlockSpec((Wi, S), lambda n: (0, 0)),
            ],
            out_specs=pl.BlockSpec((1, C2, SS), lambda n: (n, 0, 0)),
            scratch_shapes=[pltpu.VMEM((C2, SS), jnp.float32)],
        ),
        compiler_params=pltpu.CompilerParams(
            dimension_semantics=("parallel",),
            vmem_limit_bytes=32 * 1024 * 1024,
        ),
        cost_estimate=pl.CostEstimate(
            flops=flops, transcendentals=0, bytes_accessed=bytes_accessed),
    )(x1f, x2f, w1m, w2m, a_wT)
    return out.reshape(N, C2, S, S)


def fusion_ref(input1, input2, w1, w2, upsample_size):
    """Pure-JAX f32 reference matching the PyTorch forward (NCHW; gather-based
    bilinear upsample, align_corners=True)."""
    t1 = jnp.einsum('oc,nchw->nohw', w1[:, :, 0, 0], input1)
    t2 = jnp.einsum('oc,nchw->nohw', w2[:, :, 0, 0], input2)
    _, _, Hi, Wi = t1.shape
    S = int(upsample_size)

    def coords(out_size, in_size):
        if out_size == 1:
            src = jnp.zeros((1,), jnp.float32)
        else:
            src = jnp.arange(out_size, dtype=jnp.float32) * (
                (in_size - 1) / (out_size - 1))
        i0 = jnp.clip(jnp.floor(src).astype(jnp.int32), 0, in_size - 1)
        i1 = jnp.clip(i0 + 1, 0, in_size - 1)
        return i0, i1, src - i0.astype(jnp.float32)

    h0, h1, fh = coords(S, Hi)
    v0, v1, fw = coords(S, Wi)
    rows = (t1[:, :, h0, :] * (1.0 - fh)[None, None, :, None]
            + t1[:, :, h1, :] * fh[None, None, :, None])          # (N,C2,S,Wi)
    up = (rows[:, :, :, v0] * (1.0 - fw)[None, None, None, :]
          + rows[:, :, :, v1] * fw[None, None, None, :])          # (N,C2,S,S)
    return jnp.maximum(up + t2, 0.0)


if __name__ == "__main__":
    # Small shapes consistent with the module: input1 is the coarse feature map
    # (dim-reduced C1 -> C2 then upsampled), input2 already has spatial size S.
    N, C1, C2 = 2, 8, 4
    Hi = Wi = 8
    S = 16  # upsample_size

    key = jax.random.PRNGKey(0)
    k1, k2, kw1, kw2 = jax.random.split(key, 4)
    input1 = jax.random.normal(k1, (N, C1, Hi, Wi), dtype=jnp.float32)
    input2 = jax.random.normal(k2, (N, C2, S, S), dtype=jnp.float32)
    # Deterministic synthetic 1x1-conv weights, PyTorch layout (Cout, Cin, 1, 1).
    w1 = 0.1 * jax.random.normal(kw1, (C2, C1, 1, 1), dtype=jnp.float32)
    w2 = 0.1 * jax.random.normal(kw2, (C2, C2, 1, 1), dtype=jnp.float32)

    out = jax.block_until_ready(fusion(input1, input2, w1, w2, S))
    ref = jax.block_until_ready(fusion_ref(input1, input2, w1, w2, S))

    assert out.shape == (N, C2, S, S)
    # bf16 MXU inputs with f32 accumulation -> loosened tolerance vs. f32 ref.
    assert jnp.allclose(out, ref, atol=2e-2, rtol=2e-2), (
        float(jnp.max(jnp.abs(out - ref))))
    print("KERNEL_OK")
</pallas_src>

<mosaic_0001>
module attributes {stable_mosaic.version = 11 : i64} {
  func.func @kernel(%arg0: i32, %arg1: memref<1x8x128xbf16, #tpu.memory_space<vmem>>, %arg2: memref<1x4x256xbf16, #tpu.memory_space<vmem>>, %arg3: memref<4x8xbf16, #tpu.memory_space<vmem>>, %arg4: memref<4x4xbf16, #tpu.memory_space<vmem>>, %arg5: memref<8x16xbf16, #tpu.memory_space<vmem>>, %arg6: memref<1x4x256xf32, #tpu.memory_space<vmem>>, %arg7: memref<4x256xf32, #tpu.memory_space<vmem>>) attributes {dimension_semantics = [#tpu.dimension_semantics<parallel>], iteration_bounds = array<i64: 2>, scalar_prefetch = 0 : i64, scratch_operands = 1 : i64, tpu.core_type = #tpu.core_type<tc>, window_params = [{transform_indices = @transform_0, window_bounds = array<i64: 1, 8, 128>}, {transform_indices = @transform_1, window_bounds = array<i64: 1, 4, 256>}, {pipeline_mode = #tpu.pipeline_mode<synchronous>, transform_indices = @transform_2, window_bounds = array<i64: 4, 8>}, {pipeline_mode = #tpu.pipeline_mode<synchronous>, transform_indices = @transform_3, window_bounds = array<i64: 4, 4>}, {pipeline_mode = #tpu.pipeline_mode<synchronous>, transform_indices = @transform_4, window_bounds = array<i64: 8, 16>}, {transform_indices = @transform_5, window_bounds = array<i64: 1, 4, 256>}]} {
    %c0 = arith.constant 0 : index
    %c0_0 = arith.constant 0 : index
    %c0_1 = arith.constant 0 : index
    %0 = vector.load %arg1[%c0, %c0_0, %c0_1] : memref<1x8x128xbf16, #tpu.memory_space<vmem>>, vector<1x8x128xbf16>
    %1 = vector.shape_cast %0 : vector<1x8x128xbf16> to vector<8x128xbf16>
    %c0_2 = arith.constant 0 : index
    %c0_3 = arith.constant 0 : index
    %2 = vector.load %arg3[%c0_2, %c0_3] : memref<4x8xbf16, #tpu.memory_space<vmem>>, vector<4x8xbf16>
    %cst = arith.constant dense<0.000000e+00> : vector<4x128xf32>
    %3 = tpu.matmul %2, %1, %cst {dimension_numbers = #tpu.dot_dimension_numbers<[1], [0], [0], [1], [0, 0, 1, 1], [], []>} : vector<4x8xbf16>, vector<8x128xbf16>, vector<4x128xf32> -> vector<4x128xf32>
    %4 = arith.truncf %3 : vector<4x128xf32> to vector<4x128xbf16>
    %5 = vector.extract_strided_slice %4 {offsets = [0, 0], sizes = [4, 8], strides = [1, 1]} : vector<4x128xbf16> to vector<4x8xbf16>
    %c0_4 = arith.constant 0 : index
    %c0_5 = arith.constant 0 : index
    %6 = vector.load %arg5[%c0_4, %c0_5] : memref<8x16xbf16, #tpu.memory_space<vmem>>, vector<8x16xbf16>
    %cst_6 = arith.constant dense<0.000000e+00> : vector<4x16xf32>
    %7 = tpu.matmul %5, %6, %cst_6 {dimension_numbers = #tpu.dot_dimension_numbers<[1], [0], [0], [1], [0, 0, 1, 1], [], []>} : vector<4x8xbf16>, vector<8x16xbf16>, vector<4x16xf32> -> vector<4x16xf32>
    %8 = vector.extract_strided_slice %4 {offsets = [0, 8], sizes = [4, 8], strides = [1, 1]} : vector<4x128xbf16> to vector<4x8xbf16>
    %c0_7 = arith.constant 0 : index
    %c0_8 = arith.constant 0 : index
    %9 = vector.load %arg5[%c0_7, %c0_8] : memref<8x16xbf16, #tpu.memory_space<vmem>>, vector<8x16xbf16>
    %cst_9 = arith.constant dense<0.000000e+00> : vector<4x16xf32>
    %10 = tpu.matmul %8, %9, %cst_9 {dimension_numbers = #tpu.dot_dimension_numbers<[1], [0], [0], [1], [0, 0, 1, 1], [], []>} : vector<4x8xbf16>, vector<8x16xbf16>, vector<4x16xf32> -> vector<4x16xf32>
    %11 = vector.extract_strided_slice %4 {offsets = [0, 16], sizes = [4, 8], strides = [1, 1]} : vector<4x128xbf16> to vector<4x8xbf16>
    %c0_10 = arith.constant 0 : index
    %c0_11 = arith.constant 0 : index
    %12 = vector.load %arg5[%c0_10, %c0_11] : memref<8x16xbf16, #tpu.memory_space<vmem>>, vector<8x16xbf16>
    %cst_12 = arith.constant dense<0.000000e+00> : vector<4x16xf32>
    %13 = tpu.matmul %11, %12, %cst_12 {dimension_numbers = #tpu.dot_dimension_numbers<[1], [0], [0], [1], [0, 0, 1, 1], [], []>} : vector<4x8xbf16>, vector<8x16xbf16>, vector<4x16xf32> -> vector<4x16xf32>
    %14 = vector.extract_strided_slice %4 {offsets = [0, 24], sizes = [4, 8], strides = [1, 1]} : vector<4x128xbf16> to vector<4x8xbf16>
    %c0_13 = arith.constant 0 : index
    %c0_14 = arith.constant 0 : index
    %15 = vector.load %arg5[%c0_13, %c0_14] : memref<8x16xbf16, #tpu.memory_space<vmem>>, vector<8x16xbf16>
    %cst_15 = arith.constant dense<0.000000e+00> : vector<4x16xf32>
    %16 = tpu.matmul %14, %15, %cst_15 {dimension_numbers = #tpu.dot_dimension_numbers<[1], [0], [0], [1], [0, 0, 1, 1], [], []>} : vector<4x8xbf16>, vector<8x16xbf16>, vector<4x16xf32> -> vector<4x16xf32>
    %17 = vector.extract_strided_slice %4 {offsets = [0, 32], sizes = [4, 8], strides = [1, 1]} : vector<4x128xbf16> to vector<4x8xbf16>
    %c0_16 = arith.constant 0 : index
    %c0_17 = arith.constant 0 : index
    %18 = vector.load %arg5[%c0_16, %c0_17] : memref<8x16xbf16, #tpu.memory_space<vmem>>, vector<8x16xbf16>
    %cst_18 = arith.constant dense<0.000000e+00> : vector<4x16xf32>
    %19 = tpu.matmul %17, %18, %cst_18 {dimension_numbers = #tpu.dot_dimension_numbers<[1], [0], [0], [1], [0, 0, 1, 1], [], []>} : vector<4x8xbf16>, vector<8x16xbf16>, vector<4x16xf32> -> vector<4x16xf32>
    %20 = vector.extract_strided_slice %4 {offsets = [0, 40], sizes = [4, 8], strides = [1, 1]} : vector<4x128xbf16> to vector<4x8xbf16>
    %c0_19 = arith.constant 0 : index
    %c0_20 = arith.constant 0 : index
    %21 = vector.load %arg5[%c0_19, %c0_20] : memref<8x16xbf16, #tpu.memory_space<vmem>>, vector<8x16xbf16>
    %cst_21 = arith.constant dense<0.000000e+00> : vector<4x16xf32>
    %22 = tpu.matmul %20, %21, %cst_21 {dimension_numbers = #tpu.dot_dimension_numbers<[1], [0], [0], [1], [0, 0, 1, 1], [], []>} : vector<4x8xbf16>, vector<8x16xbf16>, vector<4x16xf32> -> vector<4x16xf32>
    %23 = vector.extract_strided_slice %4 {offsets = [0, 48], sizes = [4, 8], strides = [1, 1]} : vector<4x128xbf16> to vector<4x8xbf16>
    %c0_22 = arith.constant 0 : index
    %c0_23 = arith.constant 0 : index
    %24 = vector.load %arg5[%c0_22, %c0_23] : memref<8x16xbf16, #tpu.memory_space<vmem>>, vector<8x16xbf16>
    %cst_24 = arith.constant dense<0.000000e+00> : vector<4x16xf32>
    %25 = tpu.matmul %23, %24, %cst_24 {dimension_numbers = #tpu.dot_dimension_numbers<[1], [0], [0], [1], [0, 0, 1, 1], [], []>} : vector<4x8xbf16>, vector<8x16xbf16>, vector<4x16xf32> -> vector<4x16xf32>
    %26 = vector.extract_strided_slice %4 {offsets = [0, 56], sizes = [4, 8], strides = [1, 1]} : vector<4x128xbf16> to vector<4x8xbf16>
    %c0_25 = arith.constant 0 : index
    %c0_26 = arith.constant 0 : index
    %27 = vector.load %arg5[%c0_25, %c0_26] : memref<8x16xbf16, #tpu.memory_space<vmem>>, vector<8x16xbf16>
    %cst_27 = arith.constant dense<0.000000e+00> : vector<4x16xf32>
    %28 = tpu.matmul %26, %27, %cst_27 {dimension_numbers = #tpu.dot_dimension_numbers<[1], [0], [0], [1], [0, 0, 1, 1], [], []>} : vector<4x8xbf16>, vector<8x16xbf16>, vector<4x16xf32> -> vector<4x16xf32>
    %c0_28 = arith.constant 0 : index
    %c0_29 = arith.constant 0 : index
    %29 = vector.load %arg7[%c0_28, %c0_29] : memref<4x256xf32, #tpu.memory_space<vmem>>, vector<4x16xf32>
    tpu.vector_store %arg7[%c0_28, %c0_29], %7 {strides = array<i32>} : memref<4x256xf32, #tpu.memory_space<vmem>>, vector<4x16xf32>,
    %cst_30 = arith.constant 0.533333361 : f32
    %30 = vector.broadcast %cst_30 : f32 to vector<4x16xf32>
    %31 = arith.mulf %30, %7 : vector<4x16xf32>
    %cst_31 = arith.constant 0.466666669 : f32
    %32 = vector.broadcast %cst_31 : f32 to vector<4x16xf32>
    %33 = arith.mulf %32, %10 : vector<4x16xf32>
    %34 = arith.addf %31, %33 : vector<4x16xf32>
    %c0_32 = arith.constant 0 : index
    %c16 = arith.constant 16 : index
    %35 = vector.load %arg7[%c0_32, %c16] : memref<4x256xf32, #tpu.memory_space<vmem>>, vector<4x16xf32>
    tpu.vector_store %arg7[%c0_32, %c16], %34 {strides = array<i32>} : memref<4x256xf32, #tpu.memory_space<vmem>>, vector<4x16xf32>,
    %cst_33 = arith.constant 0.0666666701 : f32
    %36 = vector.broadcast %cst_33 : f32 to vector<4x16xf32>
    %37 = arith.mulf %36, %7 : vector<4x16xf32>
    %cst_34 = arith.constant 0.933333337 : f32
    %38 = vector.broadcast %cst_34 : f32 to vector<4x16xf32>
    %39 = arith.mulf %38, %10 : vector<4x16xf32>
    %40 = arith.addf %37, %39 : vector<4x16xf32>
    %c0_35 = arith.constant 0 : index
    %c32 = arith.constant 32 : index
    %41 = vector.load %arg7[%c0_35, %c32] : memref<4x256xf32, #tpu.memory_space<vmem>>, vector<4x16xf32>
    tpu.vector_store %arg7[%c0_35, %c32], %40 {strides = array<i32>} : memref<4x256xf32, #tpu.memory_space<vmem>>, vector<4x16xf32>,
    %cst_36 = arith.constant 6.000000e-01 : f32
    %42 = vector.broadcast %cst_36 : f32 to vector<4x16xf32>
    %43 = arith.mulf %42, %10 : vector<4x16xf32>
    %cst_37 = arith.constant 4.000000e-01 : f32
    %44 = vector.broadcast %cst_37 : f32 to vector<4x16xf32>
    %45 = arith.mulf %44, %13 : vector<4x16xf32>
    %46 = arith.addf %43, %45 : vector<4x16xf32>
    %c0_38 = arith.constant 0 : index
    %c48 = arith.constant 48 : index
    %47 = vector.load %arg7[%c0_38, %c48] : memref<4x256xf32, #tpu.memory_space<vmem>>, vector<4x16xf32>
    tpu.vector_store %arg7[%c0_38, %c48], %46 {strides = array<i32>} : memref<4x256xf32, #tpu.memory_space<vmem>>, vector<4x16xf32>,
    %cst_39 = arith.constant 0.13333334 : f32
    %48 = vector.broadcast %cst_39 : f32 to vector<4x16xf32>
    %49 = arith.mulf %48, %10 : vector<4x16xf32>
    %cst_40 = arith.constant 0.866666674 : f32
    %50 = vector.broadcast %cst_40 : f32 to vector<4x16xf32>
    %51 = arith.mulf %50, %13 : vector<4x16xf32>
    %52 = arith.addf %49, %51 : vector<4x16xf32>
    %c0_41 = arith.constant 0 : index
    %c64 = arith.constant 64 : index
    %53 = vector.load %arg7[%c0_41, %c64] : memref<4x256xf32, #tpu.memory_space<vmem>>, vector<4x16xf32>
    tpu.vector_store %arg7[%c0_41, %c64], %52 {strides = array<i32>} : memref<4x256xf32, #tpu.memory_space<vmem>>, vector<4x16xf32>,
    %cst_42 = arith.constant 0.666666686 : f32
    %54 = vector.broadcast %cst_42 : f32 to vector<4x16xf32>
    %55 = arith.mulf %54, %13 : vector<4x16xf32>
    %cst_43 = arith.constant 0.333333343 : f32
    %56 = vector.broadcast %cst_43 : f32 to vector<4x16xf32>
    %57 = arith.mulf %56, %16 : vector<4x16xf32>
    %58 = arith.addf %55, %57 : vector<4x16xf32>
    %c0_44 = arith.constant 0 : index
    %c80 = arith.constant 80 : index
    %59 = vector.load %arg7[%c0_44, %c80] : memref<4x256xf32, #tpu.memory_space<vmem>>, vector<4x16xf32>
    tpu.vector_store %arg7[%c0_44, %c80], %58 {strides = array<i32>} : memref<4x256xf32, #tpu.memory_space<vmem>>, vector<4x16xf32>,
    %cst_45 = arith.constant 2.000000e-01 : f32
    %60 = vector.broadcast %cst_45 : f32 to vector<4x16xf32>
    %61 = arith.mulf %60, %13 : vector<4x16xf32>
    %cst_46 = arith.constant 8.000000e-01 : f32
    %62 = vector.broadcast %cst_46 : f32 to vector<4x16xf32>
    %63 = arith.mulf %62, %16 : vector<4x16xf32>
    %64 = arith.addf %61, %63 : vector<4x16xf32>
    %c0_47 = arith.constant 0 : index
    %c96 = arith.constant 96 : index
    %65 = vector.load %arg7[%c0_47, %c96] : memref<4x256xf32, #tpu.memory_space<vmem>>, vector<4x16xf32>
    tpu.vector_store %arg7[%c0_47, %c96], %64 {strides = array<i32>} : memref<4x256xf32, #tpu.memory_space<vmem>>, vector<4x16xf32>,
    %cst_48 = arith.constant 0.733333349 : f32
    %66 = vector.broadcast %cst_48 : f32 to vector<4x16xf32>
    %67 = arith.mulf %66, %16 : vector<4x16xf32>
    %cst_49 = arith.constant 0.266666681 : f32
    %68 = vector.broadcast %cst_49 : f32 to vector<4x16xf32>
    %69 = arith.mulf %68, %19 : vector<4x16xf32>
    %70 = arith.addf %67, %69 : vector<4x16xf32>
    %c0_50 = arith.constant 0 : index
    %c112 = arith.constant 112 : index
    %71 = vector.load %arg7[%c0_50, %c112] : memref<4x256xf32, #tpu.memory_space<vmem>>, vector<4x16xf32>
    tpu.vector_store %arg7[%c0_50, %c112], %70 {strides = array<i32>} : memref<4x256xf32, #tpu.memory_space<vmem>>, vector<4x16xf32>,
    %cst_51 = arith.constant 0.266666681 : f32
    %72 = vector.broadcast %cst_51 : f32 to vector<4x16xf32>
    %73 = arith.mulf %72, %16 : vector<4x16xf32>
    %cst_52 = arith.constant 0.733333349 : f32
    %74 = vector.broadcast %cst_52 : f32 to vector<4x16xf32>
    %75 = arith.mulf %74, %19 : vector<4x16xf32>
    %76 = arith.addf %73, %75 : vector<4x16xf32>
    %c0_53 = arith.constant 0 : index
    %c128 = arith.constant 128 : index
    %77 = vector.load %arg7[%c0_53, %c128] : memref<4x256xf32, #tpu.memory_space<vmem>>, vector<4x16xf32>
    tpu.vector_store %arg7[%c0_53, %c128], %76 {strides = array<i32>} : memref<4x256xf32, #tpu.memory_space<vmem>>, vector<4x16xf32>,
    %cst_54 = arith.constant 8.000000e-01 : f32
    %78 = vector.broadcast %cst_54 : f32 to vector<4x16xf32>
    %79 = arith.mulf %78, %19 : vector<4x16xf32>
    %cst_55 = arith.constant 2.000000e-01 : f32
    %80 = vector.broadcast %cst_55 : f32 to vector<4x16xf32>
    %81 = arith.mulf %80, %22 : vector<4x16xf32>
    %82 = arith.addf %79, %81 : vector<4x16xf32>
    %c0_56 = arith.constant 0 : index
    %c144 = arith.constant 144 : index
    %83 = vector.load %arg7[%c0_56, %c144] : memref<4x256xf32, #tpu.memory_space<vmem>>, vector<4x16xf32>
    tpu.vector_store %arg7[%c0_56, %c144], %82 {strides = array<i32>} : memref<4x256xf32, #tpu.memory_space<vmem>>, vector<4x16xf32>,
    %cst_57 = arith.constant 0.333333343 : f32
    %84 = vector.broadcast %cst_57 : f32 to vector<4x16xf32>
    %85 = arith.mulf %84, %19 : vector<4x16xf32>
    %cst_58 = arith.constant 0.666666686 : f32
    %86 = vector.broadcast %cst_58 : f32 to vector<4x16xf32>
    %87 = arith.mulf %86, %22 : vector<4x16xf32>
    %88 = arith.addf %85, %87 : vector<4x16xf32>
    %c0_59 = arith.constant 0 : index
    %c160 = arith.constant 160 : index
    %89 = vector.load %arg7[%c0_59, %c160] : memref<4x256xf32, #tpu.memory_space<vmem>>, vector<4x16xf32>
    tpu.vector_store %arg7[%c0_59, %c160], %88 {strides = array<i32>} : memref<4x256xf32, #tpu.memory_space<vmem>>, vector<4x16xf32>,
    %cst_60 = arith.constant 0.866666674 : f32
    %90 = vector.broadcast %cst_60 : f32 to vector<4x16xf32>
    %91 = arith.mulf %90, %22 : vector<4x16xf32>
    %cst_61 = arith.constant 0.13333334 : f32
    %92 = vector.broadcast %cst_61 : f32 to vector<4x16xf32>
    %93 = arith.mulf %92, %25 : vector<4x16xf32>
    %94 = arith.addf %91, %93 : vector<4x16xf32>
    %c0_62 = arith.constant 0 : index
    %c176 = arith.constant 176 : index
    %95 = vector.load %arg7[%c0_62, %c176] : memref<4x256xf32, #tpu.memory_space<vmem>>, vector<4x16xf32>
    tpu.vector_store %arg7[%c0_62, %c176], %94 {strides = array<i32>} : memref<4x256xf32, #tpu.memory_space<vmem>>, vector<4x16xf32>,
    %cst_63 = arith.constant 4.000000e-01 : f32
    %96 = vector.broadcast %cst_63 : f32 to vector<4x16xf32>
    %97 = arith.mulf %96, %22 : vector<4x16xf32>
    %cst_64 = arith.constant 6.000000e-01 : f32
    %98 = vector.broadcast %cst_64 : f32 to vector<4x16xf32>
    %99 = arith.mulf %98, %25 : vector<4x16xf32>
    %100 = arith.addf %97, %99 : vector<4x16xf32>
    %c0_65 = arith.constant 0 : index
    %c192 = arith.constant 192 : index
    %101 = vector.load %arg7[%c0_65, %c192] : memref<4x256xf32, #tpu.memory_space<vmem>>, vector<4x16xf32>
    tpu.vector_store %arg7[%c0_65, %c192], %100 {strides = array<i32>} : memref<4x256xf32, #tpu.memory_space<vmem>>, vector<4x16xf32>,
    %cst_66 = arith.constant 0.933333337 : f32
    %102 = vector.broadcast %cst_66 : f32 to vector<4x16xf32>
    %103 = arith.mulf %102, %25 : vector<4x16xf32>
    %cst_67 = arith.constant 0.0666666701 : f32
    %104 = vector.broadcast %cst_67 : f32 to vector<4x16xf32>
    %105 = arith.mulf %104, %28 : vector<4x16xf32>
    %106 = arith.addf %103, %105 : vector<4x16xf32>
    %c0_68 = arith.constant 0 : index
    %c208 = arith.constant 208 : index
    %107 = vector.load %arg7[%c0_68, %c208] : memref<4x256xf32, #tpu.memory_space<vmem>>, vector<4x16xf32>
    tpu.vector_store %arg7[%c0_68, %c208], %106 {strides = array<i32>} : memref<4x256xf32, #tpu.memory_space<vmem>>, vector<4x16xf32>,
    %cst_69 = arith.constant 0.466666669 : f32
    %108 = vector.broadcast %cst_69 : f32 to vector<4x16xf32>
    %109 = arith.mulf %108, %25 : vector<4x16xf32>
    %cst_70 = arith.constant 0.533333361 : f32
    %110 = vector.broadcast %cst_70 : f32 to vector<4x16xf32>
    %111 = arith.mulf %110, %28 : vector<4x16xf32>
    %112 = arith.addf %109, %111 : vector<4x16xf32>
    %c0_71 = arith.constant 0 : index
    %c224 = arith.constant 224 : index
    %113 = vector.load %arg7[%c0_71, %c224] : memref<4x256xf32, #tpu.memory_space<vmem>>, vector<4x16xf32>
    tpu.vector_store %arg7[%c0_71, %c224], %112 {strides = array<i32>} : memref<4x256xf32, #tpu.memory_space<vmem>>, vector<4x16xf32>,
    %c0_72 = arith.constant 0 : index
    %c240 = arith.constant 240 : index
    %114 = vector.load %arg7[%c0_72, %c240] : memref<4x256xf32, #tpu.memory_space<vmem>>, vector<4x16xf32>
    tpu.vector_store %arg7[%c0_72, %c240], %28 {strides = array<i32>} : memref<4x256xf32, #tpu.memory_space<vmem>>, vector<4x16xf32>,
    %c0_73 = arith.constant 0 : index
    %c0_74 = arith.constant 0 : index
    %115 = vector.load %arg4[%c0_73, %c0_74] : memref<4x4xbf16, #tpu.memory_space<vmem>>, vector<4x4xbf16>
    %c0_75 = arith.constant 0 : index
    %c0_76 = arith.constant 0 : index
    %c0_77 = arith.constant 0 : index
    %116 = vector.load %arg2[%c0_75, %c0_76, %c0_77] : memref<1x4x256xbf16, #tpu.memory_space<vmem>>, vector<1x4x256xbf16>
    %117 = vector.shape_cast %116 : vector<1x4x256xbf16> to vector<4x256xbf16>
    %cst_78 = arith.constant dense<0.000000e+00> : vector<4x256xf32>
    %118 = tpu.matmul %115, %117, %cst_78 {dimension_numbers = #tpu.dot_dimension_numbers<[1], [0], [0], [1], [0, 0, 1, 1], [], []>} : vector<4x4xbf16>, vector<4x256xbf16>, vector<4x256xf32> -> vector<4x256xf32>
    %c0_79 = arith.constant 0 : index
    %c0_80 = arith.constant 0 : index
    %119 = vector.load %arg7[%c0_79, %c0_80] : memref<4x256xf32, #tpu.memory_space<vmem>>, vector<4x256xf32>
    %120 = arith.addf %119, %118 : vector<4x256xf32>
    %cst_81 = arith.constant 0.000000e+00 : f32
    %121 = vector.broadcast %cst_81 : f32 to vector<4x256xf32>
    %122 = arith.maximumf %120, %121 : vector<4x256xf32>
    %c0_82 = arith.constant 0 : index
    %c0_83 = arith.constant 0 : index
    %c0_84 = arith.constant 0 : index
    %123 = vector.load %arg6[%c0_82, %c0_83, %c0_84] : memref<1x4x256xf32, #tpu.memory_space<vmem>>, vector<1x4x256xf32>
    %124 = vector.shape_cast %123 : vector<1x4x256xf32> to vector<4x256xf32>
    %125 = vector.shape_cast %122 : vector<4x256xf32> to vector<1x4x256xf32>
    tpu.vector_store %arg6[%c0_82, %c0_83, %c0_84], %125 {strides = array<i32>} : memref<1x4x256xf32, #tpu.memory_space<vmem>>, vector<1x4x256xf32>,
    return
  }
  func.func @transform_0(%arg0: i32) -> (i32, i32, i32) {
    %c0_i32 = arith.constant 0 : i32
    %c0_i32_0 = arith.constant 0 : i32
    %c0_i32_1 = arith.constant 0 : i32
    return %arg0, %c0_i32, %c0_i32_0 : i32, i32, i32
  }
  func.func @transform_1(%arg0: i32) -> (i32, i32, i32) {
    %c0_i32 = arith.constant 0 : i32
    %c0_i32_0 = arith.constant 0 : i32
    %c0_i32_1 = arith.constant 0 : i32
    return %arg0, %c0_i32, %c0_i32_0 : i32, i32, i32
  }
  func.func @transform_2(%arg0: i32) -> (i32, i32) {
    %c0_i32 = arith.constant 0 : i32
    %c0_i32_0 = arith.constant 0 : i32
    %c0_i32_1 = arith.constant 0 : i32
    return %c0_i32, %c0_i32_0 : i32, i32
  }
  func.func @transform_3(%arg0: i32) -> (i32, i32) {
    %c0_i32 = arith.constant 0 : i32
    %c0_i32_0 = arith.constant 0 : i32
    %c0_i32_1 = arith.constant 0 : i32
    return %c0_i32, %c0_i32_0 : i32, i32
  }
  func.func @transform_4(%arg0: i32) -> (i32, i32) {
    %c0_i32 = arith.constant 0 : i32
    %c0_i32_0 = arith.constant 0 : i32
    %c0_i32_1 = arith.constant 0 : i32
    return %c0_i32, %c0_i32_0 : i32, i32
  }
  func.func @transform_5(%arg0: i32) -> (i32, i32, i32) {
    %c0_i32 = arith.constant 0 : i32
    %c0_i32_0 = arith.constant 0 : i32
    %c0_i32_1 = arith.constant 0 : i32
    return %arg0, %c0_i32, %c0_i32_0 : i32, i32, i32
  }
}

</mosaic_0001>

<llo_original>
// kernel: tpu_custom_call.1
$region0: #{tpu_custom_call.1}
  #allocation0 [shape = 'u32[]', space=smem, size = 0x4, offset = 0x4, fixed_abs, tag = 'smem constant byte address 0x4 - core index']
  #allocation1 [shape = 'u32[144,128]{1,0:T(1,128)}', space=vmem, size = 0x12000, scoped, tag = 'internal scratch']
  #allocation2 [shape = 'f32[4,256]{1,0:T(4,128)}', space=vmem, size = 0x1000, scoped, tag = 'scratch operand']
  %s0 = inlined_call_operand.hbm [shape: bf16[2,8,128], index: 0, kind: input, shape index: {}]
  %s1 = inlined_call_operand.hbm [shape: bf16[2,4,256], index: 1, kind: input, shape index: {}]
  %s2 = inlined_call_operand.vmem [shape: bf16[4,8], index: 2, kind: input, shape index: {}]
  %s3 = inlined_call_operand.hbm [shape: bf16[4,4], index: 3, kind: input, shape index: {}]
  %s4 = inlined_call_operand.vmem [shape: bf16[8,16], index: 4, kind: input, shape index: {}]
  %s5 = inlined_call_operand.hbm [shape: f32[2,4,256], index: 5, kind: output, shape index: {}]
  %s6 = sld [smem:[#allocation0]]
  $region65: #{tpu_custom_call.1} parent=0
    _
  %s8 = ssub.s32 1, %s6
  %s9 = scalar_select 0, %s8, %s6
  $region1: #{tpu_custom_call.1} parent=0
    #allocation3 [shape = 'u8[4096]{0}', space=vmem, size = 0x1000, scoped, tag = 'input window, operand 0']
    #allocation4 [shape = 's32[2]{0}', space=sflag, size = 0x8, scoped, tag = 'scoped memory for tpu_custom_call.1']
    #allocation5 [shape = 's32[2]{0}', space=sflag, size = 0x8, scoped, tag = 'scoped memory for tpu_custom_call.1']
    #allocation6 [shape = 'u8[4096]{0}', space=vmem, size = 0x1000, scoped, tag = 'input window, operand 1']
    #allocation7 [shape = 's32[2]{0}', space=sflag, size = 0x8, scoped, tag = 'scoped memory for tpu_custom_call.1']
    #allocation8 [shape = 'u8[1024]{0}', space=vmem, size = 0x400, scoped, tag = 'input window, operand 3, single buffered']
    #allocation9 [shape = 'u8[8192]{0}', space=vmem, size = 0x2000, scoped, tag = 'output window, operand 0']
    %10 = vsyncpa [#allocation4], 0
    %s11 = scalar_lea.sflag [#allocation4], 1
    %12 = vsyncpa %s11, 0
    %13 = vsyncpa [#allocation7], 0
    %s14 = scalar_lea.sflag [#allocation7], 1
    %15 = vsyncpa %s14, 0
    %16 = vsyncpa [#allocation5], 0
    %s17 = scalar_lea.sflag [#allocation5], 1
    %18 = vsyncpa %s17, 0
    loop: start=0, step=1, limit=4
    $region2: #{tpu_custom_call.1} parent=1 // loop_pre_header
      _
    $region3: #{tpu_custom_call.1} parent=1 // loop_header
      %s20 = sphi 0, %s24
      %p21 = scmp.ge.s32.totalorder %s20, 4
      %s30 = sphi 0, %s32
      %s33 = sphi 0, %s30
      %s34 = sphi 0, %s33
      %s50 = sphi 0, %s34
      %s56 = sphi 0, %s58
      %s59 = sphi 0, %s56
      %s60 = sphi 0, %s59
      %s76 = sphi 0, %s60
      %s80 = sphi 0, %s80
      %s82 = sphi 0, %s80
      %s83 = sphi 0, %s82
      %s97 = sphi 0, %s83
      %s101 = sphi 0, %s101
      %s103 = sphi 0, %s101
      %s104 = sphi 0, %s103
      %s118 = sphi 0, %s104
      %s122 = sphi 0, %s122
      %s124 = sphi 0, %s122
      %s125 = sphi 0, %s124
      %s139 = sphi 0, %s125
      %s145 = sphi 0, %s147
      %s148 = sphi 0, %s145
      %s149 = sphi 0, %s148
      %s165 = sphi 0, %s149
    $region4: #{tpu_custom_call.1} parent=1 // loop_header_branch
      %23 = sbr.rel (%p21) target = $region8
    $region5: #{tpu_custom_call.1} parent=1 // loop_body
      %s25 = ssub.s32 %s20, 1
      %s26 = ssub.s32 %s20, 2
      %s27 = sadd.s32 %s20, 1
      %s28 = ssub.s32 %s20, %s27
      %p29 = scmp.eq.s32.totalorder %s28, 0
      %s31 = sadd.s32 %s30, 1
      %s32 = scalar_select %p29, %s30, %s31
      %p35 = pneg %p29
      %p36 = scmp.eq.s32.totalorder %s20, 1
      %p37 = por %p35, %p36
      %p38 = scmp.ne.s32.totalorder %s30, %s33
      %p39 = scmp.eq.s32.totalorder %s20, 0
      %p40 = por %p38, %p39
      %p41 = scmp.ne.s32.totalorder %s30, %s33
      %p42 = scmp.eq.s32.totalorder %s25, 1
      %p43 = por %p41, %p42
      %p44 = scmp.ne.s32.totalorder %s33, %s34
      %p45 = scmp.eq.s32.totalorder %s25, 0
      %p46 = por %p44, %p45
      %p47 = scmp.ne.s32.totalorder %s33, %s34
      %p48 = scmp.eq.s32.totalorder %s26, 1
      %p49 = por %p47, %p48
      %p51 = scmp.ne.s32.totalorder %s34, %s50
      %p52 = scmp.eq.s32.totalorder %s26, 0
      %p53 = por %p51, %p52
      %s54 = ssub.s32 %s20, %s27
      %p55 = scmp.eq.s32.totalorder %s54, 0
      %s57 = sadd.s32 %s56, 1
      %s58 = scalar_select %p55, %s56, %s57
      %p61 = pneg %p55
      %p62 = scmp.eq.s32.totalorder %s20, 1
      %p63 = por %p61, %p62
      %p64 = scmp.ne.s32.totalorder %s56, %s59
      %p65 = scmp.eq.s32.totalorder %s20, 0
      %p66 = por %p64, %p65
      %p67 = scmp.ne.s32.totalorder %s56, %s59
      %p68 = scmp.eq.s32.totalorder %s25, 1
      %p69 = por %p67, %p68
      %p70 = scmp.ne.s32.totalorder %s59, %s60
      %p71 = scmp.eq.s32.totalorder %s25, 0
      %p72 = por %p70, %p71
      %p73 = scmp.ne.s32.totalorder %s59, %s60
      %p74 = scmp.eq.s32.totalorder %s26, 1
      %p75 = por %p73, %p74
      %p77 = scmp.ne.s32.totalorder %s60, %s76
      %p78 = scmp.eq.s32.totalorder %s26, 0
      %p79 = por %p77, %p78
      %s81 = sadd.s32 %s80, 1
      %p84 = scmp.eq.s32.totalorder %s20, 1
      %p85 = scmp.ne.s32.totalorder %s80, %s82
      %p86 = scmp.eq.s32.totalorder %s20, 0
      %p87 = por %p85, %p86
      %p88 = scmp.ne.s32.totalorder %s80, %s82
      %p89 = scmp.eq.s32.totalorder %s25, 1
      %p90 = por %p88, %p89
      %p91 = scmp.ne.s32.totalorder %s82, %s83
      %p92 = scmp.eq.s32.totalorder %s25, 0
      %p93 = por %p91, %p92
      %p94 = scmp.ne.s32.totalorder %s82, %s83
      %p95 = scmp.eq.s32.totalorder %s26, 1
      %p96 = por %p94, %p95
      %p98 = scmp.ne.s32.totalorder %s83, %s97
      %p99 = scmp.eq.s32.totalorder %s26, 0
      %p100 = por %p98, %p99
      %s102 = sadd.s32 %s101, 1
      %p105 = scmp.eq.s32.totalorder %s20, 1
      %p106 = scmp.ne.s32.totalorder %s101, %s103
      %p107 = scmp.eq.s32.totalorder %s20, 0
      %p108 = por %p106, %p107
      %p109 = scmp.ne.s32.totalorder %s101, %s103
      %p110 = scmp.eq.s32.totalorder %s25, 1
      %p111 = por %p109, %p110
      %p112 = scmp.ne.s32.totalorder %s103, %s104
      %p113 = scmp.eq.s32.totalorder %s25, 0
      %p114 = por %p112, %p113
      %p115 = scmp.ne.s32.totalorder %s103, %s104
      %p116 = scmp.eq.s32.totalorder %s26, 1
      %p117 = por %p115, %p116
      %p119 = scmp.ne.s32.totalorder %s104, %s118
      %p120 = scmp.eq.s32.totalorder %s26, 0
      %p121 = por %p119, %p120
      %s123 = sadd.s32 %s122, 1
      %p126 = scmp.eq.s32.totalorder %s20, 1
      %p127 = scmp.ne.s32.totalorder %s122, %s124
      %p128 = scmp.eq.s32.totalorder %s20, 0
      %p129 = por %p127, %p128
      %p130 = scmp.ne.s32.totalorder %s122, %s124
      %p131 = scmp.eq.s32.totalorder %s25, 1
      %p132 = por %p130, %p131
      %p133 = scmp.ne.s32.totalorder %s124, %s125
      %p134 = scmp.eq.s32.totalorder %s25, 0
      %p135 = por %p133, %p134
      %p136 = scmp.ne.s32.totalorder %s124, %s125
      %p137 = scmp.eq.s32.totalorder %s26, 1
      %p138 = por %p136, %p137
      %p140 = scmp.ne.s32.totalorder %s125, %s139
      %p141 = scmp.eq.s32.totalorder %s26, 0
      %p142 = por %p140, %p141
      %s143 = ssub.s32 %s20, %s27
      %p144 = scmp.eq.s32.totalorder %s143, 0
      %s146 = sadd.s32 %s145, 1
      %s147 = scalar_select %p144, %s145, %s146
      %p150 = pneg %p144
      %p151 = scmp.eq.s32.totalorder %s20, 1
      %p152 = por %p150, %p151
      %p153 = scmp.ne.s32.totalorder %s145, %s148
      %p154 = scmp.eq.s32.totalorder %s20, 0
      %p155 = por %p153, %p154
      %p156 = scmp.ne.s32.totalorder %s145, %s148
      %p157 = scmp.eq.s32.totalorder %s25, 1
      %p158 = por %p156, %p157
      %p159 = scmp.ne.s32.totalorder %s148, %s149
      %p160 = scmp.eq.s32.totalorder %s25, 0
      %p161 = por %p159, %p160
      %p162 = scmp.ne.s32.totalorder %s148, %s149
      %p163 = scmp.eq.s32.totalorder %s26, 1
      %p164 = por %p162, %p163
      %p166 = scmp.ne.s32.totalorder %s149, %s165
      %p167 = scmp.eq.s32.totalorder %s26, 0
      %p168 = por %p166, %p167
      %p169 = scmp.le.s32.totalorder 1, %s20
      %p170 = scmp.lt.s32.totalorder %s20, 3
      %p171 = pnand %p169, %p170
      %p172 = pneg %p171
      // Predicated region
      $region9: #{tpu_custom_call.1} parent=5 // pred_check
        _
      $region10: #{tpu_custom_call.1} parent=5 // pred_check_branch
        %174 = sbr.rel (%p171) target = $region12
      $region11: #{tpu_custom_call.1} parent=5 // pred_region
        %s175 = ssub.s32 %s20, 1
        // Predicated region
        $region13: #{tpu_custom_call.1} parent=11 // pred_check
          %p176 = pneg %p93
        $region14: #{tpu_custom_call.1} parent=11 // pred_check_branch
          %178 = sbr.rel (%p176) target = $region16
        $region15: #{tpu_custom_call.1} parent=11 // pred_region
          _
        $region16: #{tpu_custom_call.1} parent=11 // pred_fallthru
          _
        // Predicated region
        $region17: #{tpu_custom_call.1} parent=11 // pred_check
          %p179 = pneg %p114
        $region18: #{tpu_custom_call.1} parent=11 // pred_check_branch
          %181 = sbr.rel (%p179) target = $region20
        $region19: #{tpu_custom_call.1} parent=11 // pred_region
          %s183 = ssub.s32 32, 32
          %184 = vsyncadd [#allocation7], %s183
          %s186 = sshll.u32 [#allocation8], 4
          %s187 = int_to_ptr.vmem [resolvable:$true] %s186
          %189 = dma.hbm_to_vmem [thread:$0]  %s3, 32, %s187, [#allocation7]
        $region20: #{tpu_custom_call.1} parent=11 // pred_fallthru
          _
        // Predicated region
        $region21: #{tpu_custom_call.1} parent=11 // pred_check
          %p190 = pneg %p135
        $region22: #{tpu_custom_call.1} parent=11 // pred_check_branch
          %192 = sbr.rel (%p190) target = $region24
        $region23: #{tpu_custom_call.1} parent=11 // pred_region
          _
        $region24: #{tpu_custom_call.1} parent=11 // pred_fallthru
          _
      $region12: #{tpu_custom_call.1} parent=5 // pred_fallthru
        _
      %p193 = scmp.lt.s32.totalorder %s20, 2
      // Predicated region
      $region25: #{tpu_custom_call.1} parent=5 // pred_check
        %p194 = pneg %p193
      $region26: #{tpu_custom_call.1} parent=5 // pred_check_branch
        %196 = sbr.rel (%p194) target = $region28
      $region27: #{tpu_custom_call.1} parent=5 // pred_region
        // Predicated region
        $region29: #{tpu_custom_call.1} parent=27 // pred_check
          %p197 = pneg %p40
        $region30: #{tpu_custom_call.1} parent=27 // pred_check_branch
          %199 = sbr.rel (%p197) target = $region32
        $region31: #{tpu_custom_call.1} parent=27 // pred_region
          %s200 = sand.u32 %s30, 1
          %s201 = scalar_lea.sflag [#allocation4], %s200
          %s202 = sand.u32 %s30, 1
          %s203 = smul.addr %s202, 4
          %s204 = scalar_lea.vmem [#allocation3], %s203
          %s206 = ssub.s32 64, 64
          %207 = vsyncadd %s201, %s206
          %s208 = smul.addr %s20, 64
          %s209 = scalar_lea.hbm %s0, %s208
          %s211 = sshll.u32 %s204, 4
          %s212 = int_to_ptr.vmem [resolvable:$true] %s211
          %214 = dma.hbm_to_vmem [thread:$0]  %s209, 64, %s212, %s201
        $region32: #{tpu_custom_call.1} parent=27 // pred_fallthru
          _
        // Predicated region
        $region33: #{tpu_custom_call.1} parent=27 // pred_check
          %p215 = pneg %p66
        $region34: #{tpu_custom_call.1} parent=27 // pred_check_branch
          %217 = sbr.rel (%p215) target = $region36
        $region35: #{tpu_custom_call.1} parent=27 // pred_region
          %s218 = sand.u32 %s20, 1
          %s219 = scalar_lea.sflag [#allocation7], %s218
          %s220 = sand.u32 %s56, 1
          %s221 = smul.addr %s220, 4
          %s222 = scalar_lea.vmem [#allocation6], %s221
          %s224 = ssub.s32 64, 64
          %225 = vsyncadd %s219, %s224
          %s226 = smul.addr %s20, 2
          %s227 = smul.addr %s226, 32
          %s228 = scalar_lea.hbm %s1, %s227
          %s230 = sshll.u32 %s222, 4
          %s231 = int_to_ptr.vmem [resolvable:$true] %s230
          %233 = dma.hbm_to_vmem [thread:$0]  %s228, 64, %s231, %s219
        $region36: #{tpu_custom_call.1} parent=27 // pred_fallthru
          _
      $region28: #{tpu_custom_call.1} parent=5 // pred_fallthru
        _
      %p234 = scmp.le.s32.totalorder 1, %s20
      %p235 = scmp.lt.s32.totalorder %s20, 3
      %p236 = pnand %p234, %p235
      %p237 = pneg %p236
      // Predicated region
      $region37: #{tpu_custom_call.1} parent=5 // pred_check
        _
      $region38: #{tpu_custom_call.1} parent=5 // pred_check_branch
        %239 = sbr.rel (%p236) target = $region40
      $region39: #{tpu_custom_call.1} parent=5 // pred_region
        %s240 = ssub.s32 %s20, 1
        %s241 = sand.u32 %s33, 1
        %s242 = scalar_lea.sflag [#allocation4], %s241
        %s243 = sand.u32 %s33, 1
        %s244 = smul.addr %s243, 4
        %s245 = scalar_lea.vmem [#allocation3], %s244
        // Predicated region
        $region41: #{tpu_custom_call.1} parent=39 // pred_check
          %p246 = pneg %p46
        $region42: #{tpu_custom_call.1} parent=39 // pred_check_branch
          %248 = sbr.rel (%p246) target = $region44
        $region43: #{tpu_custom_call.1} parent=39 // pred_region
          %249 = dma.done %s242, 64
        $region44: #{tpu_custom_call.1} parent=39 // pred_fallthru
          _
        %s250 = sand.u32 %s25, 1
        %s251 = scalar_lea.sflag [#allocation7], %s250
        %s252 = sand.u32 %s59, 1
        %s253 = smul.addr %s252, 4
        %s254 = scalar_lea.vmem [#allocation6], %s253
        // Predicated region
        $region45: #{tpu_custom_call.1} parent=39 // pred_check
          %p255 = pneg %p72
        $region46: #{tpu_custom_call.1} parent=39 // pred_check_branch
          %257 = sbr.rel (%p255) target = $region48
        $region47: #{tpu_custom_call.1} parent=39 // pred_region
          %258 = dma.done %s251, 64
        $region48: #{tpu_custom_call.1} parent=39 // pred_fallthru
          _
        // Predicated region
        $region49: #{tpu_custom_call.1} parent=39 // pred_check
          %p259 = pneg %p114
        $region50: #{tpu_custom_call.1} parent=39 // pred_check_branch
          %261 = sbr.rel (%p259) target = $region52
        $region51: #{tpu_custom_call.1} parent=39 // pred_region
          %262 = dma.done [#allocation7], 32
        $region52: #{tpu_custom_call.1} parent=39 // pred_fallthru
          _
        %s263 = sand.u32 %s33, 1
        %s264 = scalar_lea.sflag [#allocation4], %s263
        %s265 = sand.u32 %s33, 1
        %s266 = smul.addr %s265, 4
        %s267 = scalar_lea.vmem [#allocation3], %s266
        %p268 = pneg %p46
        %p269 = pneg %p43
        %s270 = sand.u32 %s25, 1
        %s271 = scalar_lea.sflag [#allocation7], %s270
        %s272 = sand.u32 %s59, 1
        %s273 = smul.addr %s272, 4
        %s274 = scalar_lea.vmem [#allocation6], %s273
        %p275 = pneg %p72
        %p276 = pneg %p69
        %p277 = pneg %p93
        %p278 = pneg %p90
        %p279 = pneg %p114
        %p280 = pneg %p111
        %p281 = pneg %p135
        %p282 = pneg %p132
        %p283 = pneg %p161
        %p284 = pneg %p158
        %s285 = sand.u32 %s148, 1
        %s286 = scalar_lea.sflag [#allocation5], %s285
        %s287 = sand.u32 %s148, 1
        %s288 = smul.addr %s287, 8
        %s289 = scalar_lea.vmem [#allocation9], %s288
        %v291 = vld [vmem:[%s245] sm:$0xf]
        %v292 = vld [vmem:[%s2] sm:$0x3]
        %vm293 = vcmask 64512
        %v295 = vsel %vm293, %v292, 0
        %vm297 = vcmask 1043456
        %v299 = vsel %vm297, %v291, 0
        %301 = vmatprep.subr.bf16.mxu0 0
        %302 = vmatpush1.bf16.msra.mxu0 0
        %303 = vmatprep.subr.bf16.mxu0 0
        %304 = vmatpush1.bf16.msra.mxu0 0
        %305 = vmatprep.subr.bf16.mxu0 0
        %306 = vmatpush1.bf16.msra.mxu0 0
        %307 = vmatprep.subr.bf16.mxu0 0
        %308 = vmatpush1.bf16.msra.mxu0 0
        %309 = vmatprep.subr.bf16.mxu0 0
        %310 = vmatpush1.bf16.msra.mxu0 0
        %311 = vmatprep.subr.bf16.mxu0 0
        %312 = vmatpush1.bf16.msra.mxu0 0
        %313 = vmatprep.subr.bf16.mxu0 0
        %314 = vmatpush1.bf16.msra.mxu0 0
        %315 = vmatprep.subr.bf16.mxu0 0
        %316 = vmatpush1.bf16.msra.mxu0 %v299
        %317 = vmatprep.subr.bf16.mxu0 0
        %318 = vmatpush2.bf16.msra.mxu0 0
        %319 = vmatprep.subr.bf16.mxu0 0
        %320 = vmatpush2.bf16.msra.mxu0 0
        %321 = vmatprep.subr.bf16.mxu0 0
        %322 = vmatpush2.bf16.msra.mxu0 0
        %323 = vmatprep.subr.bf16.mxu0 0
        %324 = vmatpush2.bf16.msra.mxu0 0
        %325 = vmatprep.subr.bf16.mxu0 0
        %326 = vmatpush2.bf16.msra.mxu0 0
        %327 = vmatprep.subr.bf16.mxu0 0
        %328 = vmatpush2.bf16.msra.mxu0 0
        %329 = vmatprep.subr.bf16.mxu0 0
        %330 = vmatpush2.bf16.msra.mxu0 0
        %331 = vmatprep.subr.bf16.mxu0 0
        %332 = vmatpush2.bf16.msra.mxu0 0
        %333 = vmatprep.mubr.bf16.mxu0 0
        %334 = vmatmul.mubr.bf16.gmra.mxu0 %v295
        %v335 = vpop.f32.mrf.mxu0
        %v336 = vadd.f32 0.0, %v335
        %v337 = vpop.f32.mrf.mxu0
        %v338 = vpop.f32.mrf.mxu0
        %v339 = vpop.f32.mrf.mxu0
        %340 = vdwg.mxu0
        %v341 = vpack.c.bf16 %v336, %v336
        %v342 = vld [vmem:[%s4] sm:$0xf]
        %v344 = vsel %vm293, %v341, 0
        %v347 = vsel %vm297, %v342, 0
        %349 = vmatprep.subr.bf16.mxu0 0
        %350 = vmatpush1.bf16.msra.mxu0 0
        %351 = vmatprep.subr.bf16.mxu0 0
        %352 = vmatpush1.bf16.msra.mxu0 0
        %353 = vmatprep.subr.bf16.mxu0 0
        %354 = vmatpush1.bf16.msra.mxu0 0
        %355 = vmatprep.subr.bf16.mxu0 0
        %356 = vmatpush1.bf16.msra.mxu0 0
        %357 = vmatprep.subr.bf16.mxu0 0
        %358 = vmatpush1.bf16.msra.mxu0 0
        %359 = vmatprep.subr.bf16.mxu0 0
        %360 = vmatpush1.bf16.msra.mxu0 0
        %361 = vmatprep.subr.bf16.mxu0 0
        %362 = vmatpush1.bf16.msra.mxu0 0
        %363 = vmatprep.subr.bf16.mxu0 0
        %364 = vmatpush1.bf16.msra.mxu0 %v347
        %365 = vmatprep.subr.bf16.mxu0 0
        %366 = vmatpush2.bf16.msra.mxu0 0
        %367 = vmatprep.subr.bf16.mxu0 0
        %368 = vmatpush2.bf16.msra.mxu0 0
        %369 = vmatprep.subr.bf16.mxu0 0
        %370 = vmatpush2.bf16.msra.mxu0 0
        %371 = vmatprep.subr.bf16.mxu0 0
        %372 = vmatpush2.bf16.msra.mxu0 0
        %373 = vmatprep.subr.bf16.mxu0 0
        %374 = vmatpush2.bf16.msra.mxu0 0
        %375 = vmatprep.subr.bf16.mxu0 0
        %376 = vmatpush2.bf16.msra.mxu0 0
        %377 = vmatprep.subr.bf16.mxu0 0
        %378 = vmatpush2.bf16.msra.mxu0 0
        %379 = vmatprep.subr.bf16.mxu0 0
        %380 = vmatpush2.bf16.msra.mxu0 0
        %381 = vmatprep.mubr.bf16.mxu0 0
        %382 = vmatmul.mubr.bf16.gmra.mxu0 %v344
        %v383 = vpop.f32.mrf.mxu0
        %v384 = vadd.f32 0.0, %v383
        %v385 = vpop.f32.mrf.mxu0
        %v386 = vpop.f32.mrf.mxu0
        %v387 = vpop.f32.mrf.mxu0
        %388 = vdwg.mxu0
        %390 = vrot.lane.b32.xlu0 %v341, 120
        %v391 = vpop.permute.xlu0 %390
        %v393 = vsel %vm293, %v391, 0
        %395 = vmatprep.subr.bf16.mxu0 0
        %396 = vmatpush1.bf16.msra.mxu0 0
        %397 = vmatprep.subr.bf16.mxu0 0
        %398 = vmatpush1.bf16.msra.mxu0 0
        %399 = vmatprep.subr.bf16.mxu0 0
        %400 = vmatpush1.bf16.msra.mxu0 0
        %401 = vmatprep.subr.bf16.mxu0 0
        %402 = vmatpush1.bf16.msra.mxu0 0
        %403 = vmatprep.subr.bf16.mxu0 0
        %404 = vmatpush1.bf16.msra.mxu0 0
        %405 = vmatprep.subr.bf16.mxu0 0
        %406 = vmatpush1.bf16.msra.mxu0 0
        %407 = vmatprep.subr.bf16.mxu0 0
        %408 = vmatpush1.bf16.msra.mxu0 0
        %409 = vmatprep.subr.bf16.mxu0 0
        %410 = vmatpush1.bf16.msra.mxu0 %v347
        %411 = vmatprep.subr.bf16.mxu0 0
        %412 = vmatpush2.bf16.msra.mxu0 0
        %413 = vmatprep.subr.bf16.mxu0 0
        %414 = vmatpush2.bf16.msra.mxu0 0
        %415 = vmatprep.subr.bf16.mxu0 0
        %416 = vmatpush2.bf16.msra.mxu0 0
        %417 = vmatprep.subr.bf16.mxu0 0
        %418 = vmatpush2.bf16.msra.mxu0 0
        %419 = vmatprep.subr.bf16.mxu0 0
        %420 = vmatpush2.bf16.msra.mxu0 0
        %421 = vmatprep.subr.bf16.mxu0 0
        %422 = vmatpush2.bf16.msra.mxu0 0
        %423 = vmatprep.subr.bf16.mxu0 0
        %424 = vmatpush2.bf16.msra.mxu0 0
        %425 = vmatprep.subr.bf16.mxu0 0
        %426 = vmatpush2.bf16.msra.mxu0 0
        %427 = vmatprep.mubr.bf16.mxu0 0
        %428 = vmatmul.mubr.bf16.gmra.mxu0 %v393
        %v429 = vpop.f32.mrf.mxu0
        %v430 = vadd.f32 0.0, %v429
        %v431 = vpop.f32.mrf.mxu0
        %v432 = vpop.f32.mrf.mxu0
        %v433 = vpop.f32.mrf.mxu0
        %434 = vdwg.mxu0
        %435 = vrot.lane.b32.xlu0 %v341, 112
        %v436 = vpop.permute.xlu0 %435
        %v438 = vsel %vm293, %v436, 0
        %440 = vmatprep.subr.bf16.mxu0 0
        %441 = vmatpush1.bf16.msra.mxu0 0
        %442 = vmatprep.subr.bf16.mxu0 0
        %443 = vmatpush1.bf16.msra.mxu0 0
        %444 = vmatprep.subr.bf16.mxu0 0
        %445 = vmatpush1.bf16.msra.mxu0 0
        %446 = vmatprep.subr.bf16.mxu0 0
        %447 = vmatpush1.bf16.msra.mxu0 0
        %448 = vmatprep.subr.bf16.mxu0 0
        %449 = vmatpush1.bf16.msra.mxu0 0
        %450 = vmatprep.subr.bf16.mxu0 0
        %451 = vmatpush1.bf16.msra.mxu0 0
        %452 = vmatprep.subr.bf16.mxu0 0
        %453 = vmatpush1.bf16.msra.mxu0 0
        %454 = vmatprep.subr.bf16.mxu0 0
        %455 = vmatpush1.bf16.msra.mxu0 %v347
        %456 = vmatprep.subr.bf16.mxu0 0
        %457 = vmatpush2.bf16.msra.mxu0 0
        %458 = vmatprep.subr.bf16.mxu0 0
        %459 = vmatpush2.bf16.msra.mxu0 0
        %460 = vmatprep.subr.bf16.mxu0 0
        %461 = vmatpush2.bf16.msra.mxu0 0
        %462 = vmatprep.subr.bf16.mxu0 0
        %463 = vmatpush2.bf16.msra.mxu0 0
        %464 = vmatprep.subr.bf16.mxu0 0
        %465 = vmatpush2.bf16.msra.mxu0 0
        %466 = vmatprep.subr.bf16.mxu0 0
        %467 = vmatpush2.bf16.msra.mxu0 0
        %468 = vmatprep.subr.bf16.mxu0 0
        %469 = vmatpush2.bf16.msra.mxu0 0
        %470 = vmatprep.subr.bf16.mxu0 0
        %471 = vmatpush2.bf16.msra.mxu0 0
        %472 = vmatprep.mubr.bf16.mxu0 0
        %473 = vmatmul.mubr.bf16.gmra.mxu0 %v438
        %v474 = vpop.f32.mrf.mxu0
        %v475 = vadd.f32 0.0, %v474
        %v476 = vpop.f32.mrf.mxu0
        %v477 = vpop.f32.mrf.mxu0
        %v478 = vpop.f32.mrf.mxu0
        %479 = vdwg.mxu0
        %480 = vrot.lane.b32.xlu0 %v341, 104
        %v481 = vpop.permute.xlu0 %480
        %v483 = vsel %vm293, %v481, 0
        %485 = vmatprep.subr.bf16.mxu0 0
        %486 = vmatpush1.bf16.msra.mxu0 0
        %487 = vmatprep.subr.bf16.mxu0 0
        %488 = vmatpush1.bf16.msra.mxu0 0
        %489 = vmatprep.subr.bf16.mxu0 0
        %490 = vmatpush1.bf16.msra.mxu0 0
        %491 = vmatprep.subr.bf16.mxu0 0
        %492 = vmatpush1.bf16.msra.mxu0 0
        %493 = vmatprep.subr.bf16.mxu0 0
        %494 = vmatpush1.bf16.msra.mxu0 0
        %495 = vmatprep.subr.bf16.mxu0 0
        %496 = vmatpush1.bf16.msra.mxu0 0
        %497 = vmatprep.subr.bf16.mxu0 0
        %498 = vmatpush1.bf16.msra.mxu0 0
        %499 = vmatprep.subr.bf16.mxu0 0
        %500 = vmatpush1.bf16.msra.mxu0 %v347
        %501 = vmatprep.subr.bf16.mxu0 0
        %502 = vmatpush2.bf16.msra.mxu0 0
        %503 = vmatprep.subr.bf16.mxu0 0
        %504 = vmatpush2.bf16.msra.mxu0 0
        %505 = vmatprep.subr.bf16.mxu0 0
        %506 = vmatpush2.bf16.msra.mxu0 0
        %507 = vmatprep.subr.bf16.mxu0 0
        %508 = vmatpush2.bf16.msra.mxu0 0
        %509 = vmatprep.subr.bf16.mxu0 0
        %510 = vmatpush2.bf16.msra.mxu0 0
        %511 = vmatprep.subr.bf16.mxu0 0
        %512 = vmatpush2.bf16.msra.mxu0 0
        %513 = vmatprep.subr.bf16.mxu0 0
        %514 = vmatpush2.bf16.msra.mxu0 0
        %515 = vmatprep.subr.bf16.mxu0 0
        %516 = vmatpush2.bf16.msra.mxu0 0
        %517 = vmatprep.mubr.bf16.mxu0 0
        %518 = vmatmul.mubr.bf16.gmra.mxu0 %v483
        %v519 = vpop.f32.mrf.mxu0
        %v520 = vadd.f32 0.0, %v519
        %v521 = vpop.f32.mrf.mxu0
        %v522 = vpop.f32.mrf.mxu0
        %v523 = vpop.f32.mrf.mxu0
        %524 = vdwg.mxu0
        %525 = vrot.lane.b32.xlu0 %v341, 96
        %v526 = vpop.permute.xlu0 %525
        %v528 = vsel %vm293, %v526, 0
        %530 = vmatprep.subr.bf16.mxu0 0
        %531 = vmatpush1.bf16.msra.mxu0 0
        %532 = vmatprep.subr.bf16.mxu0 0
        %533 = vmatpush1.bf16.msra.mxu0 0
        %534 = vmatprep.subr.bf16.mxu0 0
        %535 = vmatpush1.bf16.msra.mxu0 0
        %536 = vmatprep.subr.bf16.mxu0 0
        %537 = vmatpush1.bf16.msra.mxu0 0
        %538 = vmatprep.subr.bf16.mxu0 0
        %539 = vmatpush1.bf16.msra.mxu0 0
        %540 = vmatprep.subr.bf16.mxu0 0
        %541 = vmatpush1.bf16.msra.mxu0 0
        %542 = vmatprep.subr.bf16.mxu0 0
        %543 = vmatpush1.bf16.msra.mxu0 0
        %544 = vmatprep.subr.bf16.mxu0 0
        %545 = vmatpush1.bf16.msra.mxu0 %v347
        %546 = vmatprep.subr.bf16.mxu0 0
        %547 = vmatpush2.bf16.msra.mxu0 0
        %548 = vmatprep.subr.bf16.mxu0 0
        %549 = vmatpush2.bf16.msra.mxu0 0
        %550 = vmatprep.subr.bf16.mxu0 0
        %551 = vmatpush2.bf16.msra.mxu0 0
        %552 = vmatprep.subr.bf16.mxu0 0
        %553 = vmatpush2.bf16.msra.mxu0 0
        %554 = vmatprep.subr.bf16.mxu0 0
        %555 = vmatpush2.bf16.msra.mxu0 0
        %556 = vmatprep.subr.bf16.mxu0 0
        %557 = vmatpush2.bf16.msra.mxu0 0
        %558 = vmatprep.subr.bf16.mxu0 0
        %559 = vmatpush2.bf16.msra.mxu0 0
        %560 = vmatprep.subr.bf16.mxu0 0
        %561 = vmatpush2.bf16.msra.mxu0 0
        %562 = vmatprep.mubr.bf16.mxu0 0
        %563 = vmatmul.mubr.bf16.gmra.mxu0 %v528
        %v564 = vpop.f32.mrf.mxu0
        %v565 = vadd.f32 0.0, %v564
        %v566 = vpop.f32.mrf.mxu0
        %v567 = vpop.f32.mrf.mxu0
        %v568 = vpop.f32.mrf.mxu0
        %569 = vdwg.mxu0
        %570 = vrot.lane.b32.xlu0 %v341, 88
        %v571 = vpop.permute.xlu0 %570
        %v573 = vsel %vm293, %v571, 0
        %575 = vmatprep.subr.bf16.mxu0 0
        %576 = vmatpush1.bf16.msra.mxu0 0
        %577 = vmatprep.subr.bf16.mxu0 0
        %578 = vmatpush1.bf16.msra.mxu0 0
        %579 = vmatprep.subr.bf16.mxu0 0
        %580 = vmatpush1.bf16.msra.mxu0 0
        %581 = vmatprep.subr.bf16.mxu0 0
        %582 = vmatpush1.bf16.msra.mxu0 0
        %583 = vmatprep.subr.bf16.mxu0 0
        %584 = vmatpush1.bf16.msra.mxu0 0
        %585 = vmatprep.subr.bf16.mxu0 0
        %586 = vmatpush1.bf16.msra.mxu0 0
        %587 = vmatprep.subr.bf16.mxu0 0
        %588 = vmatpush1.bf16.msra.mxu0 0
        %589 = vmatprep.subr.bf16.mxu0 0
        %590 = vmatpush1.bf16.msra.mxu0 %v347
        %591 = vmatprep.subr.bf16.mxu0 0
        %592 = vmatpush2.bf16.msra.mxu0 0
        %593 = vmatprep.subr.bf16.mxu0 0
        %594 = vmatpush2.bf16.msra.mxu0 0
        %595 = vmatprep.subr.bf16.mxu0 0
        %596 = vmatpush2.bf16.msra.mxu0 0
        %597 = vmatprep.subr.bf16.mxu0 0
        %598 = vmatpush2.bf16.msra.mxu0 0
        %599 = vmatprep.subr.bf16.mxu0 0
        %600 = vmatpush2.bf16.msra.mxu0 0
        %601 = vmatprep.subr.bf16.mxu0 0
        %602 = vmatpush2.bf16.msra.mxu0 0
        %603 = vmatprep.subr.bf16.mxu0 0
        %604 = vmatpush2.bf16.msra.mxu0 0
        %605 = vmatprep.subr.bf16.mxu0 0
        %606 = vmatpush2.bf16.msra.mxu0 0
        %607 = vmatprep.mubr.bf16.mxu0 0
        %608 = vmatmul.mubr.bf16.gmra.mxu0 %v573
        %v609 = vpop.f32.mrf.mxu0
        %v610 = vadd.f32 0.0, %v609
        %v611 = vpop.f32.mrf.mxu0
        %v612 = vpop.f32.mrf.mxu0
        %v613 = vpop.f32.mrf.mxu0
        %614 = vdwg.mxu0
        %615 = vrot.lane.b32.xlu0 %v341, 80
        %v616 = vpop.permute.xlu0 %615
        %v618 = vsel %vm293, %v616, 0
        %620 = vmatprep.subr.bf16.mxu0 0
        %621 = vmatpush1.bf16.msra.mxu0 0
        %622 = vmatprep.subr.bf16.mxu0 0
        %623 = vmatpush1.bf16.msra.mxu0 0
        %624 = vmatprep.subr.bf16.mxu0 0
        %625 = vmatpush1.bf16.msra.mxu0 0
        %626 = vmatprep.subr.bf16.mxu0 0
        %627 = vmatpush1.bf16.msra.mxu0 0
        %628 = vmatprep.subr.bf16.mxu0 0
        %629 = vmatpush1.bf16.msra.mxu0 0
        %630 = vmatprep.subr.bf16.mxu0 0
        %631 = vmatpush1.bf16.msra.mxu0 0
        %632 = vmatprep.subr.bf16.mxu0 0
        %633 = vmatpush1.bf16.msra.mxu0 0
        %634 = vmatprep.subr.bf16.mxu0 0
        %635 = vmatpush1.bf16.msra.mxu0 %v347
        %636 = vmatprep.subr.bf16.mxu0 0
        %637 = vmatpush2.bf16.msra.mxu0 0
        %638 = vmatprep.subr.bf16.mxu0 0
        %639 = vmatpush2.bf16.msra.mxu0 0
        %640 = vmatprep.subr.bf16.mxu0 0
        %641 = vmatpush2.bf16.msra.mxu0 0
        %642 = vmatprep.subr.bf16.mxu0 0
        %643 = vmatpush2.bf16.msra.mxu0 0
        %644 = vmatprep.subr.bf16.mxu0 0
        %645 = vmatpush2.bf16.msra.mxu0 0
        %646 = vmatprep.subr.bf16.mxu0 0
        %647 = vmatpush2.bf16.msra.mxu0 0
        %648 = vmatprep.subr.bf16.mxu0 0
        %649 = vmatpush2.bf16.msra.mxu0 0
        %650 = vmatprep.subr.bf16.mxu0 0
        %651 = vmatpush2.bf16.msra.mxu0 0
        %652 = vmatprep.mubr.bf16.mxu0 0
        %653 = vmatmul.mubr.bf16.gmra.mxu0 %v618
        %v654 = vpop.f32.mrf.mxu0
        %v655 = vadd.f32 0.0, %v654
        %v656 = vpop.f32.mrf.mxu0
        %v657 = vpop.f32.mrf.mxu0
        %v658 = vpop.f32.mrf.mxu0
        %659 = vdwg.mxu0
        %660 = vrot.lane.b32.xlu0 %v341, 72
        %v661 = vpop.permute.xlu0 %660
        %v663 = vsel %vm293, %v661, 0
        %665 = vmatprep.subr.bf16.mxu0 0
        %666 = vmatpush1.bf16.msra.mxu0 0
        %667 = vmatprep.subr.bf16.mxu0 0
        %668 = vmatpush1.bf16.msra.mxu0 0
        %669 = vmatprep.subr.bf16.mxu0 0
        %670 = vmatpush1.bf16.msra.mxu0 0
        %671 = vmatprep.subr.bf16.mxu0 0
        %672 = vmatpush1.bf16.msra.mxu0 0
        %673 = vmatprep.subr.bf16.mxu0 0
        %674 = vmatpush1.bf16.msra.mxu0 0
        %675 = vmatprep.subr.bf16.mxu0 0
        %676 = vmatpush1.bf16.msra.mxu0 0
        %677 = vmatprep.subr.bf16.mxu0 0
        %678 = vmatpush1.bf16.msra.mxu0 0
        %679 = vmatprep.subr.bf16.mxu0 0
        %680 = vmatpush1.bf16.msra.mxu0 %v347
        %681 = vmatprep.subr.bf16.mxu0 0
        %682 = vmatpush2.bf16.msra.mxu0 0
        %683 = vmatprep.subr.bf16.mxu0 0
        %684 = vmatpush2.bf16.msra.mxu0 0
        %685 = vmatprep.subr.bf16.mxu0 0
        %686 = vmatpush2.bf16.msra.mxu0 0
        %687 = vmatprep.subr.bf16.mxu0 0
        %688 = vmatpush2.bf16.msra.mxu0 0
        %689 = vmatprep.subr.bf16.mxu0 0
        %690 = vmatpush2.bf16.msra.mxu0 0
        %691 = vmatprep.subr.bf16.mxu0 0
        %692 = vmatpush2.bf16.msra.mxu0 0
        %693 = vmatprep.subr.bf16.mxu0 0
        %694 = vmatpush2.bf16.msra.mxu0 0
        %695 = vmatprep.subr.bf16.mxu0 0
        %696 = vmatpush2.bf16.msra.mxu0 0
        %697 = vmatprep.mubr.bf16.mxu0 0
        %698 = vmatmul.mubr.bf16.gmra.mxu0 %v663
        %v699 = vpop.f32.mrf.mxu0
        %v700 = vadd.f32 0.0, %v699
        %v701 = vpop.f32.mrf.mxu0
        %v702 = vpop.f32.mrf.mxu0
        %v703 = vpop.f32.mrf.mxu0
        %704 = vdwg.mxu0
        %vm705 = vcmask 125952
        %706 = vst.msk [vmem:[#allocation2] sm:$0xf] %vm705, %v384
        %v707 = vmul.f32 %v384, 0.53333336
        %v708 = vmul.f32 %v430, 0.46666667
        %v709 = vadd.f32 %v707, %v708
        %711 = vrot.lane.b32.xlu0 %v709, 16
        %v712 = vpop.permute.xlu0 %711
        %vm714 = vcmask 257152
        %715 = vst.msk [vmem:[#allocation2] sm:$0xf] %vm714, %v712
        %v716 = vmul.f32 %v384, 0.06666667
        %v717 = vmul.f32 %v430, 0.93333334
        %v718 = vadd.f32 %v716, %v717
        %720 = vrot.lane.b32.xlu0 %v718, 32
        %v721 = vpop.permute.xlu0 %720
        %vm723 = vcmask 388352
        %724 = vst.msk [vmem:[#allocation2] sm:$0xf] %vm723, %v721
        %v725 = vmul.f32 %v430, 0.6
        %v726 = vmul.f32 %v475, 0.4
        %v727 = vadd.f32 %v725, %v726
        %729 = vrot.lane.b32.xlu0 %v727, 48
        %v730 = vpop.permute.xlu0 %729
        %vm732 = vcmask 519552
        %733 = vst.msk [vmem:[#allocation2] sm:$0xf] %vm732, %v730
        %v734 = vmul.f32 %v430, 0.13333334
        %v735 = vmul.f32 %v475, 0.8666667
        %v736 = vadd.f32 %v734, %v735
        %738 = vrot.lane.b32.xlu0 %v736, 64
        %v739 = vpop.permute.xlu0 %738
        %vm741 = vcmask 650752
        %742 = vst.msk [vmem:[#allocation2] sm:$0xf] %vm741, %v739
        %v743 = vmul.f32 %v475, 0.6666667
        %v744 = vmul.f32 %v520, 0.33333334
        %v745 = vadd.f32 %v743, %v744
        %747 = vrot.lane.b32.xlu0 %v745, 80
        %v748 = vpop.permute.xlu0 %747
        %vm750 = vcmask 781952
        %751 = vst.msk [vmem:[#allocation2] sm:$0xf] %vm750, %v748
        %v752 = vmul.f32 %v475, 0.2
        %v753 = vmul.f32 %v520, 0.8
        %v754 = vadd.f32 %v752, %v753
        %756 = vrot.lane.b32.xlu0 %v754, 96
        %v757 = vpop.permute.xlu0 %756
        %vm759 = vcmask 913152
        %760 = vst.msk [vmem:[#allocation2] sm:$0xf] %vm759, %v757
        %v761 = vmul.f32 %v520, 0.73333335
        %v762 = vmul.f32 %v565, 0.26666668
        %v763 = vadd.f32 %v761, %v762
        %765 = vrot.lane.b32.xlu0 %v763, 112
        %v766 = vpop.permute.xlu0 %765
        %vm768 = vcmask 1044352
        %769 = vst.msk [vmem:[#allocation2] sm:$0xf] %vm768, %v766
        %v770 = vmul.f32 %v520, 0.26666668
        %v771 = vmul.f32 %v565, 0.73333335
        %v772 = vadd.f32 %v770, %v771
        %773 = vst.msk [vmem:[#allocation2 + $0x4] sm:$0xf] %vm705, %v772
        %v774 = vmul.f32 %v565, 0.8
        %v775 = vmul.f32 %v610, 0.2
        %v776 = vadd.f32 %v774, %v775
        %778 = vrot.lane.b32.xlu0 %v776, 16
        %v779 = vpop.permute.xlu0 %778
        %781 = vst.msk [vmem:[#allocation2 + $0x4] sm:$0xf] %vm714, %v779
        %v782 = vmul.f32 %v565, 0.33333334
        %v783 = vmul.f32 %v610, 0.6666667
        %v784 = vadd.f32 %v782, %v783
        %786 = vrot.lane.b32.xlu0 %v784, 32
        %v787 = vpop.permute.xlu0 %786
        %789 = vst.msk [vmem:[#allocation2 + $0x4] sm:$0xf] %vm723, %v787
        %v790 = vmul.f32 %v610, 0.8666667
        %v791 = vmul.f32 %v655, 0.13333334
        %v792 = vadd.f32 %v790, %v791
        %794 = vrot.lane.b32.xlu0 %v792, 48
        %v795 = vpop.permute.xlu0 %794
        %797 = vst.msk [vmem:[#allocation2 + $0x4] sm:$0xf] %vm732, %v795
        %v798 = vmul.f32 %v610, 0.4
        %v799 = vmul.f32 %v655, 0.6
        %v800 = vadd.f32 %v798, %v799
        %802 = vrot.lane.b32.xlu0 %v800, 64
        %v803 = vpop.permute.xlu0 %802
        %805 = vst.msk [vmem:[#allocation2 + $0x4] sm:$0xf] %vm741, %v803
        %v806 = vmul.f32 %v655, 0.93333334
        %v807 = vmul.f32 %v700, 0.06666667
        %v808 = vadd.f32 %v806, %v807
        %810 = vrot.lane.b32.xlu0 %v808, 80
        %v811 = vpop.permute.xlu0 %810
        %813 = vst.msk [vmem:[#allocation2 + $0x4] sm:$0xf] %vm750, %v811
        %v814 = vmul.f32 %v655, 0.46666667
        %v815 = vmul.f32 %v700, 0.53333336
        %v816 = vadd.f32 %v814, %v815
        %818 = vrot.lane.b32.xlu0 %v816, 96
        %v819 = vpop.permute.xlu0 %818
        %821 = vst.msk [vmem:[#allocation2 + $0x4] sm:$0xf] %vm759, %v819
        %823 = vrot.lane.b32.xlu0 %v700, 112
        %v824 = vpop.permute.xlu0 %823
        %826 = vst.msk [vmem:[#allocation2 + $0x4] sm:$0xf] %vm768, %v824
        %v827 = vld [vmem:[#allocation8] sm:$0x3]
        %v828 = vld [vmem:[%s254] sm:$0xf]
        %v831 = vunpack.c.l.s4 1983009808
        %v832 = vunpack.c.0.s8 %v831
        %v833 = vlaneseq
        %v834 = vshrl.u32 %v833, 7
        %v835 = vsub.s32 %v832, %v834
        %v836 = vrot.slane %v828, %v835
        %v837 = vcombine.high %v836, %v836
        %vm838 = vcmask 31744
        %v840 = vsel %vm838, %v827, 0
        %vm842 = vcmask 1041408
        %v844 = vsel %vm842, %v836, 0
        %v847 = vsel %vm842, %v837, 0
        %849 = vmatprep.subr.bf16.mxu0 0
        %850 = vmatpush1.bf16.msra.mxu0 0
        %851 = vmatprep.subr.bf16.mxu0 0
        %852 = vmatpush1.bf16.msra.mxu0 0
        %853 = vmatprep.subr.bf16.mxu0 0
        %854 = vmatpush1.bf16.msra.mxu0 0
        %855 = vmatprep.subr.bf16.mxu0 0
        %856 = vmatpush1.bf16.msra.mxu0 0
        %857 = vmatprep.subr.bf16.mxu0 0
        %858 = vmatpush1.bf16.msra.mxu0 0
        %859 = vmatprep.subr.bf16.mxu0 0
        %860 = vmatpush1.bf16.msra.mxu0 0
        %861 = vmatprep.subr.bf16.mxu0 0
        %862 = vmatpush1.bf16.msra.mxu0 0
        %863 = vmatprep.subr.bf16.mxu0 %v847
        %864 = vmatpush1.bf16.msra.mxu0 %v844
        %865 = vmatprep.subr.bf16.mxu0 0
        %866 = vmatpush2.bf16.msra.mxu0 0
        %867 = vmatprep.subr.bf16.mxu0 0
        %868 = vmatpush2.bf16.msra.mxu0 0
        %869 = vmatprep.subr.bf16.mxu0 0
        %870 = vmatpush2.bf16.msra.mxu0 0
        %871 = vmatprep.subr.bf16.mxu0 0
        %872 = vmatpush2.bf16.msra.mxu0 0
        %873 = vmatprep.subr.bf16.mxu0 0
        %874 = vmatpush2.bf16.msra.mxu0 0
        %875 = vmatprep.subr.bf16.mxu0 0
        %876 = vmatpush2.bf16.msra.mxu0 0
        %877 = vmatprep.subr.bf16.mxu0 0
        %878 = vmatpush2.bf16.msra.mxu0 0
        %879 = vmatprep.subr.bf16.mxu0 0
        %880 = vmatpush2.bf16.msra.mxu0 0
        %881 = vmatprep.mubr.bf16.mxu0 0
        %882 = vmatmul.mubr.bf16.gmra.mxu0 %v840
        %v883 = vpop.f32.mrf.mxu0
        %v884 = vadd.f32 0.0, %v883
        %v885 = vpop.f32.mrf.mxu0
        %v886 = vadd.f32 0.0, %v885
        %v887 = vpop.f32.mrf.mxu0
        %v888 = vpop.f32.mrf.mxu0
        %889 = vdwg.mxu0
        %v890 = vld [vmem:[#allocation2] sm:$0xff]
        %v893 = vcombine.low %v884, %v886
        %v895 = vadd.f32 %v890, %v893
        %v896 = vmax.f32 %v895, 0.0
        %897 = vst [vmem:[%s289] sm:$0xff] %v896
        %s898 = sand.u32 %s148, 1
        %s899 = scalar_lea.sflag [#allocation5], %s898
        %s900 = sand.u32 %s148, 1
        %s901 = smul.addr %s900, 8
        %s902 = scalar_lea.vmem [#allocation9], %s901
        // Predicated region
        $region53: #{tpu_custom_call.1} parent=39 // pred_check
          %p903 = pneg %p158
        $region54: #{tpu_custom_call.1} parent=39 // pred_check_branch
          %905 = sbr.rel (%p903) target = $region56
        $region55: #{tpu_custom_call.1} parent=39 // pred_region
          %s907 = ssub.s32 128, 128
          %908 = vsyncadd %s899, %s907
          %s909 = smul.addr %s25, 2
          %s910 = smul.addr %s909, 64
          %s911 = scalar_lea.hbm %s5, %s910
          %s913 = sshll.u32 %s902, 4
          %s914 = int_to_ptr.vmem [resolvable:$true] %s913
          %916 = dma.vmem_to_hbm [thread:$0]  %s914, 128, %s911, %s899
        $region56: #{tpu_custom_call.1} parent=39 // pred_fallthru
          _
      $region40: #{tpu_custom_call.1} parent=5 // pred_fallthru
        _
      %p917 = scmp.le.s32.totalorder 2, %s20
      // Predicated region
      $region57: #{tpu_custom_call.1} parent=5 // pred_check
        %p918 = pneg %p917
      $region58: #{tpu_custom_call.1} parent=5 // pred_check_branch
        %920 = sbr.rel (%p918) target = $region60
      $region59: #{tpu_custom_call.1} parent=5 // pred_region
        %s921 = ssub.s32 %s20, 2
        // Predicated region
        $region61: #{tpu_custom_call.1} parent=59 // pred_check
          %p922 = pneg %p164
        $region62: #{tpu_custom_call.1} parent=59 // pred_check_branch
          %924 = sbr.rel (%p922) target = $region64
        $region63: #{tpu_custom_call.1} parent=59 // pred_region
          %s925 = sand.u32 %s149, 1
          %s926 = scalar_lea.sflag [#allocation5], %s925
          %s927 = sand.u32 %s149, 1
          %s928 = smul.addr %s927, 8
          %s929 = scalar_lea.vmem [#allocation9], %s928
          %930 = dma.done %s926, 128
        $region64: #{tpu_custom_call.1} parent=59 // pred_fallthru
          _
      $region60: #{tpu_custom_call.1} parent=5 // pred_fallthru
        _
    $region6: #{tpu_custom_call.1} parent=1 // loop_footer
      %s24 = sadd.s32 1, %s20
    $region7: #{tpu_custom_call.1} parent=1 // loop_footer_branch
      %19 = sbr.rel target = $region3
    $region8: #{tpu_custom_call.1} parent=1 // loop_exit
      _
    %931 = vsyncpa [#allocation4], 1
    %s932 = scalar_lea.sflag [#allocation4], 1
    %933 = vsyncpa %s932, 1
    %934 = vsyncpa [#allocation7], 1
    %s935 = scalar_lea.sflag [#allocation7], 1
    %936 = vsyncpa %s935, 1
    %937 = vsyncpa [#allocation5], 1
    %s938 = scalar_lea.sflag [#allocation5], 1
    %939 = vsyncpa %s938, 1

</llo_original>
